<compile_context>
chip_gen: v6e
topology: v6e:2x2x1
jax: 0.10.0
libtpu: 0.0.40
codegen_flags: <defaults>
</compile_context>

<pallas_src>
import functools

import jax
import jax.numpy as jnp
from jax import lax
from jax.experimental import pallas as pl
from jax.experimental.pallas import tpu as pltpu


def _round_up(a, m):
    return (a + m - 1) // m * m


def _largest_divisor_leq(n, cap):
    cap = max(1, min(int(n), int(cap)))
    for d in range(cap, 0, -1):
        if n % d == 0:
            return d
    return 1


@functools.lru_cache(maxsize=None)
def _roll_mode():
    """How to implement 'advance by d' (result[i] = src[i + d]) along an axis.

    Returns ("tpu", {axis: sign}) when pltpu.roll lowers for rank-3 f32 arrays
    on both the sublane (axis=1) and lane (axis=2) axes, where
    pltpu.roll(x, sign * d, axis)[i] == x[i + d] for non-wrapping i, or
    ("jnp", None) to fall back to jnp.roll (static slices + concat; always
    correct, just slower).  Only non-wrapping positions are ever consumed by
    the window sum, so exact circular behaviour is not required.
    """
    shape = (2, 16, 160)  # sublane len mult-of-8, lane len >128 & not mult-of-128
    x = jnp.arange(2 * 16 * 160, dtype=jnp.float32).reshape(shape)

    def probe(x_ref, o1, o2, o3, o4):
        v = x_ref[...]
        o1[...] = pltpu.roll(v, 1, axis=1)
        o2[...] = pltpu.roll(v, -3, axis=1)
        o3[...] = pltpu.roll(v, 1, axis=2)
        o4[...] = pltpu.roll(v, -3, axis=2)

    try:
        outs = pl.pallas_call(
            probe,
            out_shape=tuple(jax.ShapeDtypeStruct(shape, jnp.float32) for _ in range(4)),
        )(x)
        outs = [jax.device_get(o) for o in outs]
    except Exception:
        return ("jnp", None)

    signs = {}
    for axis, (o_p1, o_m3) in ((1, (outs[0], outs[1])), (2, (outs[2], outs[3]))):
        ref = lambda s: jax.device_get(jnp.roll(x, s, axis=axis))
        if (o_p1 == ref(1)).all() and (o_m3 == ref(-3)).all():
            signs[axis] = -1   # pltpu.roll matches jnp.roll: advance d -> shift -d
        elif (o_p1 == ref(-1)).all() and (o_m3 == ref(3)).all():
            signs[axis] = 1    # opposite convention: advance d -> shift +d
        else:
            return ("jnp", None)
    return ("tpu", signs)


def _make_advance(axis):
    """advance(a, d)[..., i, ...] = a[..., i + d, ...] along `axis` (non-wrapping
    positions only; wrapped rows are never consumed)."""
    mode, signs = _roll_mode()
    if mode == "tpu":
        sign = signs[axis]

        def advance(a, d):
            return a if d == 0 else pltpu.roll(a, sign * d, axis=axis)
    else:

        def advance(a, d):
            return a if d == 0 else jnp.roll(a, -d, axis=axis)

    return advance


def _decomp_kernel(x_ref, res_ref, mean_ref, *, k, front_n, L, A, Lp, taxis, advance):
    # Tile shapes: (Bt, L, Ct) when taxis == 1 (time on sublanes)
    #              (Bt, Ct, L) when taxis == 2 (time on lanes, small-C path)
    x = x_ref[...].astype(jnp.float32)

    # Replicate-padded working buffer of length Lp along the time axis:
    #   rows [0, A)       : x[time=0]    (A = round_up(front_n, 8) so the body
    #                                     lands at an aligned offset; the
    #                                     A - front_n surplus is folded into the
    #                                     shifts below)
    #   rows [A, A+L)     : x            (aligned copy, no sublane re-layout)
    #   rows [A+L, Lp)    : x[time=L-1]  (covers end padding + rounding slack)
    pieces = []
    if A > 0:
        first = lax.slice_in_dim(x, 0, 1, axis=taxis)
        shp = list(x.shape)
        shp[taxis] = A
        pieces.append(jnp.broadcast_to(first, tuple(shp)))
    pieces.append(x)
    tail = Lp - A - L
    if tail > 0:
        last = lax.slice_in_dim(x, L - 1, L, axis=taxis)
        shp = list(x.shape)
        shp[taxis] = tail
        pieces.append(jnp.broadcast_to(last, tuple(shp)))
    buf = pieces[0] if len(pieces) == 1 else jnp.concatenate(pieces, axis=taxis)

    # k-term sliding sum via binary doubling on full-length buffers; every shift
    # goes through `advance` (XLU roll) instead of misaligned slices.  The window
    # for output index t starts at buffer row (A - front_n) + t.
    base = A - front_n
    acc = None
    S = buf
    w = 1
    off = 0
    kk = k
    while kk:
        if kk & 1:
            term = advance(S, base + off)
            acc = term if acc is None else acc + term
            off += w
        kk >>= 1
        if kk:
            S = S + advance(S, w)
            w *= 2

    mean = lax.slice_in_dim(acc, 0, L, axis=taxis) * jnp.float32(1.0 / k)
    mean_ref[...] = mean.astype(mean_ref.dtype)
    res_ref[...] = (x - mean).astype(res_ref.dtype)


def series_decomp(x, kernel_size, out_dtype=None):
    """Returns (res, moving_mean), both shaped like x = (B, L, C).

    out_dtype may be set to e.g. jnp.bfloat16 to cut write traffic ~33% on this
    memory-bound op (accumulation stays f32); defaults to x.dtype for parity
    with the PyTorch module.
    """
    B, L, C = x.shape
    k = int(kernel_size)
    assert k >= 1
    front_n = k // 2            # matches the PyTorch module for both odd and even k
    end_n = (k - 1) // 2
    out_dtype = x.dtype if out_dtype is None else jnp.dtype(out_dtype)
    itemsize = jnp.dtype(x.dtype).itemsize

    # Padded-buffer geometry along the time axis (body at an 8-aligned offset).
    A = _round_up(front_n, 8)
    Lp = _round_up(A + L + end_n, 8)

    # Generation-aware VMEM budget (v7x: 64 MiB, v5e/v6e: 128 MiB).
    vmem_cap = 64 << 20
    try:
        vmem_cap = int(pltpu.get_tpu_info().vmem_capacity_bytes)
    except Exception:
        pass
    budget = int(vmem_cap * 0.4)

    def est_bytes(bt, ct):
        # f32 working set: x + padded buffer + doubling level + accumulator + one
        # roll temporary, plus (1 input + 2 output) double-buffered I/O tiles.
        f32 = 4 * bt * ct * (L + 4 * Lp)
        io = 2 * 3 * bt * L * ct * itemsize
        return f32 + io

    lane_path = (C < 128) and (L >= 128)
    target_in_bytes = 1 << 20   # amortize the ~0.35us per-grid-step overhead

    if lane_path:
        # Small channel count: time on lanes -> lane-dense (unmasked) stores.
        taxis = 2
        x_in = jnp.transpose(x, (0, 2, 1))      # (B, C, L)
        ct = C                                  # sublane dim of the block
    else:
        taxis = 1
        x_in = x                                # (B, L, C)
        ct_cands = [c for c in (512, 384, 256, 128) if C % c == 0]
        ct = ct_cands[0] if ct_cands else C     # lane dim (full-C escape hatch)

    bt = _largest_divisor_leq(B, max(1, target_in_bytes // max(1, L * ct * itemsize)))
    while est_bytes(bt, ct) > budget and bt > 1:
        bt = _largest_divisor_leq(B, bt - 1)
    if not lane_path:
        while est_bytes(bt, ct) > budget:
            smaller = [c for c in (384, 256, 128) if c < ct and C % c == 0]
            if not smaller:
                break
            ct = smaller[0]
    # TODO(synk): for extremely long L an extra L-tiled grid axis with a (k-1)-row
    # halo would bound VMEM further; full-L tiles are kept for typical lengths.

    # Give both v7x TensorCores work: ensure >=2 grid steps when splittable
    # (memory-bound op, splitting is free).
    if (B // bt) * (C // ct) < 2:
        if B >= 2:
            bt = _largest_divisor_leq(B, max(1, B // 2))
        elif not lane_path and ct % 256 == 0:
            ct //= 2
        elif lane_path and C >= 16 and C % 16 == 0:
            ct = C // 2

    grid = (B // bt, C // ct)
    if lane_path:
        block = (bt, ct, L)
        oshape = (B, C, L)
        index_map = lambda b, c: (b, c, 0)
    else:
        block = (bt, L, ct)
        oshape = (B, L, C)
        index_map = lambda b, c: (b, 0, c)

    est = est_bytes(bt, ct)
    vmem_limit = max(int(est * 5 // 4) + (4 << 20), 16 << 20)
    vmem_limit = min(vmem_limit, vmem_cap - (8 << 20))   # leave compiler headroom

    kernel = functools.partial(
        _decomp_kernel, k=k, front_n=front_n, L=L, A=A, Lp=Lp, taxis=taxis,
        advance=_make_advance(taxis))

    res, mean = pl.pallas_call(
        kernel,
        out_shape=(
            jax.ShapeDtypeStruct(oshape, out_dtype),
            jax.ShapeDtypeStruct(oshape, out_dtype),
        ),
        grid_spec=pltpu.PrefetchScalarGridSpec(
            num_scalar_prefetch=0,
            grid=grid,
            # NOTE: if profiling shows the input DMA exposed behind the two output
            # writebacks, add pipeline_mode=pl.Buffered(3) to this input spec.
            in_specs=[pl.BlockSpec(block, index_map)],
            out_specs=[pl.BlockSpec(block, index_map),
                       pl.BlockSpec(block, index_map)],
        ),
        compiler_params=pltpu.CompilerParams(
            dimension_semantics=("parallel", "parallel"),
            vmem_limit_bytes=int(vmem_limit),
        ),
    )(x_in)

    if lane_path:
        res = jnp.transpose(res, (0, 2, 1))
        mean = jnp.transpose(mean, (0, 2, 1))
    return res, mean


def _reference(x, kernel_size):
    # Pure-JAX reference mirroring the PyTorch semantics.
    front_n = kernel_size // 2
    end_n = (kernel_size - 1) // 2
    front = jnp.repeat(x[:, 0:1, :], front_n, axis=1)
    end = jnp.repeat(x[:, -1:, :], end_n, axis=1)
    xp = jnp.concatenate([front, x, end], axis=1)
    L = x.shape[1]
    mean = sum(xp[:, i:i + L, :] for i in range(kernel_size)) / kernel_size
    return x - mean, mean


if __name__ == "__main__":
    key = jax.random.PRNGKey(0)
    configs = [
        # (B, L, C, kernel_size)
        (2, 16, 8, 5),       # tiny, odd kernel (module-default style)
        (2, 16, 8, 4),       # even kernel (front=k//2, end=(k-1)//2)
        (1, 16, 8, 1),       # degenerate kernel_size=1 (mean == x)
        (2, 37, 16, 7),      # ragged L, full-C escape hatch
        (1, 32, 256, 25),    # lane-aligned C, Autoformer k=25, C-tiled grid
        (4, 256, 8, 25),     # small C + long L -> lane-dense transposed path
    ]
    for (B, L, C, k) in configs:
        key, sub = jax.random.split(key)
        x = jax.random.normal(sub, (B, L, C), dtype=jnp.float32)
        res, mean = series_decomp(x, k)
        jax.block_until_ready((res, mean))
        res_ref, mean_ref = _reference(x, k)
        assert jnp.allclose(res, res_ref, atol=1e-5, rtol=1e-5), ("res", B, L, C, k)
        assert jnp.allclose(mean, mean_ref, atol=1e-5, rtol=1e-5), ("mean", B, L, C, k)
    print("KERNEL_OK")
</pallas_src>

<mosaic_0001>
module attributes {stable_mosaic.version = 11 : i64} {
  func.func @_decomp_kernel(%arg0: i32, %arg1: i32, %arg2: memref<1x16x8xf32, #tpu.memory_space<vmem>>, %arg3: memref<1x16x8xf32, #tpu.memory_space<vmem>>, %arg4: memref<1x16x8xf32, #tpu.memory_space<vmem>>) attributes {dimension_semantics = [#tpu.dimension_semantics<parallel>, #tpu.dimension_semantics<parallel>], iteration_bounds = array<i64: 2, 1>, scalar_prefetch = 0 : i64, scratch_operands = 0 : i64, tpu.core_type = #tpu.core_type<tc>, window_params = [{transform_indices = @transform_0, window_bounds = array<i64: 1, 16, 8>}, {transform_indices = @transform_1, window_bounds = array<i64: 1, 16, 8>}, {transform_indices = @transform_2, window_bounds = array<i64: 1, 16, 8>}]} {
    %c0 = arith.constant 0 : index
    %c0_0 = arith.constant 0 : index
    %c0_1 = arith.constant 0 : index
    %0 = vector.load %arg2[%c0, %c0_0, %c0_1] : memref<1x16x8xf32, #tpu.memory_space<vmem>>, vector<1x16x8xf32>
    %1 = vector.extract_strided_slice %0 {offsets = [0, 0, 0], sizes = [1, 1, 8], strides = [1, 1, 1]} : vector<1x16x8xf32> to vector<1x1x8xf32>
    %2 = vector.shape_cast %1 : vector<1x1x8xf32> to vector<1x1x8xf32>
    %3 = vector.broadcast %2 : vector<1x1x8xf32> to vector<1x8x8xf32>
    %4 = vector.extract_strided_slice %0 {offsets = [0, 15, 0], sizes = [1, 1, 8], strides = [1, 1, 1]} : vector<1x16x8xf32> to vector<1x1x8xf32>
    %5 = vector.shape_cast %4 : vector<1x1x8xf32> to vector<1x1x8xf32>
    %6 = vector.broadcast %5 : vector<1x1x8xf32> to vector<1x8x8xf32>
    %7 = tpu.concatenate %3, %0, %6 in 1 : vector<1x8x8xf32>, vector<1x16x8xf32>, vector<1x8x8xf32> -> vector<1x32x8xf32>
    %8 = vector.extract_strided_slice %7 {offsets = [0, 6, 0], sizes = [1, 26, 8], strides = [1, 1, 1]} : vector<1x32x8xf32> to vector<1x26x8xf32>
    %9 = vector.extract_strided_slice %7 {offsets = [0, 0, 0], sizes = [1, 6, 8], strides = [1, 1, 1]} : vector<1x32x8xf32> to vector<1x6x8xf32>
    %10 = tpu.concatenate %8, %9 in 1 : vector<1x26x8xf32>, vector<1x6x8xf32> -> vector<1x32x8xf32>
    %11 = vector.extract_strided_slice %7 {offsets = [0, 1, 0], sizes = [1, 31, 8], strides = [1, 1, 1]} : vector<1x32x8xf32> to vector<1x31x8xf32>
    %12 = vector.extract_strided_slice %7 {offsets = [0, 0, 0], sizes = [1, 1, 8], strides = [1, 1, 1]} : vector<1x32x8xf32> to vector<1x1x8xf32>
    %13 = tpu.concatenate %11, %12 in 1 : vector<1x31x8xf32>, vector<1x1x8xf32> -> vector<1x32x8xf32>
    %14 = arith.addf %7, %13 : vector<1x32x8xf32>
    %15 = vector.extract_strided_slice %14 {offsets = [0, 2, 0], sizes = [1, 30, 8], strides = [1, 1, 1]} : vector<1x32x8xf32> to vector<1x30x8xf32>
    %16 = vector.extract_strided_slice %14 {offsets = [0, 0, 0], sizes = [1, 2, 8], strides = [1, 1, 1]} : vector<1x32x8xf32> to vector<1x2x8xf32>
    %17 = tpu.concatenate %15, %16 in 1 : vector<1x30x8xf32>, vector<1x2x8xf32> -> vector<1x32x8xf32>
    %18 = arith.addf %14, %17 : vector<1x32x8xf32>
    %19 = vector.extract_strided_slice %18 {offsets = [0, 7, 0], sizes = [1, 25, 8], strides = [1, 1, 1]} : vector<1x32x8xf32> to vector<1x25x8xf32>
    %20 = vector.extract_strided_slice %18 {offsets = [0, 0, 0], sizes = [1, 7, 8], strides = [1, 1, 1]} : vector<1x32x8xf32> to vector<1x7x8xf32>
    %21 = tpu.concatenate %19, %20 in 1 : vector<1x25x8xf32>, vector<1x7x8xf32> -> vector<1x32x8xf32>
    %22 = arith.addf %10, %21 : vector<1x32x8xf32>
    %23 = vector.extract_strided_slice %22 {offsets = [0, 0, 0], sizes = [1, 16, 8], strides = [1, 1, 1]} : vector<1x32x8xf32> to vector<1x16x8xf32>
    %cst = arith.constant 2.000000e-01 : f32
    %24 = vector.broadcast %cst : f32 to vector<1x16x8xf32>
    %25 = arith.mulf %23, %24 : vector<1x16x8xf32>
    %c0_2 = arith.constant 0 : index
    %c0_3 = arith.constant 0 : index
    %c0_4 = arith.constant 0 : index
    %26 = vector.load %arg4[%c0_2, %c0_3, %c0_4] : memref<1x16x8xf32, #tpu.memory_space<vmem>>, vector<1x16x8xf32>
    tpu.vector_store %arg4[%c0_2, %c0_3, %c0_4], %25 {strides = array<i32>} : memref<1x16x8xf32, #tpu.memory_space<vmem>>, vector<1x16x8xf32>,
    %27 = arith.subf %0, %25 : vector<1x16x8xf32>
    %c0_5 = arith.constant 0 : index
    %c0_6 = arith.constant 0 : index
    %c0_7 = arith.constant 0 : index
    %28 = vector.load %arg3[%c0_5, %c0_6, %c0_7] : memref<1x16x8xf32, #tpu.memory_space<vmem>>, vector<1x16x8xf32>
    tpu.vector_store %arg3[%c0_5, %c0_6, %c0_7], %27 {strides = array<i32>} : memref<1x16x8xf32, #tpu.memory_space<vmem>>, vector<1x16x8xf32>,
    return
  }
  func.func @transform_0(%arg0: i32, %arg1: i32) -> (i32, i32, i32) {
    %c0_i32 = arith.constant 0 : i32
    %c0_i32_0 = arith.constant 0 : i32
    return %arg0, %c0_i32, %arg1 : i32, i32, i32
  }
  func.func @transform_1(%arg0: i32, %arg1: i32) -> (i32, i32, i32) {
    %c0_i32 = arith.constant 0 : i32
    %c0_i32_0 = arith.constant 0 : i32
    return %arg0, %c0_i32, %arg1 : i32, i32, i32
  }
  func.func @transform_2(%arg0: i32, %arg1: i32) -> (i32, i32, i32) {
    %c0_i32 = arith.constant 0 : i32
    %c0_i32_0 = arith.constant 0 : i32
    return %arg0, %c0_i32, %arg1 : i32, i32, i32
  }
}

</mosaic_0001>

<llo_original>
// kernel: tpu_custom_call.1
$region0: #{tpu_custom_call.1}
  #allocation0 [shape = 'u32[]', space=smem, size = 0x4, offset = 0x4, fixed_abs, tag = 'smem constant byte address 0x4 - core index']
  #allocation1 [shape = 'u32[144,128]{1,0:T(1,128)}', space=vmem, size = 0x12000, scoped, tag = 'internal scratch']
  %s0 = inlined_call_operand.vmem [shape: f32[2,16,8], index: 0, kind: input, shape index: {}]
  %s1 = inlined_call_operand.vmem [shape: f32[2,16,8], index: 1, kind: output, shape index: {0}]
  %s2 = inlined_call_operand.vmem [shape: f32[2,16,8], index: 2, kind: output, shape index: {1}]
  %3 = xla_tuple %s1, %s2
  %s4 = sld [smem:[#allocation0]]
  $region45: #{tpu_custom_call.1} parent=0
    _
  %s6 = ssub.s32 1, %s4
  %s7 = scalar_select 0, %s6, %s4
  loop: start=0, step=1, limit=4
  $region2: #{tpu_custom_call.1} parent=0 // loop_pre_header
    _
  $region3: #{tpu_custom_call.1} parent=0 // loop_header
    %s9 = sphi 0, %s13
    %p10 = scmp.ge.s32.totalorder %s9, 4
    %s16 = sphi 0, %s28
    %s17 = sphi 0, %s24
    %s18 = sphi 0, %s16
    %s19 = sphi 0, %s17
    %s20 = sphi 0, %s18
    %s21 = sphi 0, %s19
    %s33 = sphi 0, %s35
    %s36 = sphi 0, %s33
    %s37 = sphi 0, %s36
    %s53 = sphi 0, %s37
    %s61 = sphi 0, %s63
    %s64 = sphi 0, %s61
    %s65 = sphi 0, %s64
    %s81 = sphi 0, %s65
    %s89 = sphi 0, %s91
    %s92 = sphi 0, %s89
    %s93 = sphi 0, %s92
    %s109 = sphi 0, %s93
  $region4: #{tpu_custom_call.1} parent=0 // loop_header_branch
    %12 = sbr.rel (%p10) target = $region8
  $region5: #{tpu_custom_call.1} parent=0 // loop_body
    %s14 = ssub.s32 %s9, 1
    %s15 = ssub.s32 %s9, 2
    %s22 = sadd.s32 1, %s17
    %p23 = scmp.ge.s32.totalorder %s22, 1
    %s24 = scalar_select %p23, 0, %s22
    %s25 = sadd.s32 1, %s16
    %s26 = scalar_select %p23, %s25, %s16
    %p27 = scmp.ge.s32.totalorder %s26, 2
    %s28 = scalar_select %p27, 0, %s26
    %s29 = ssub.s32 %s16, %s28
    %s30 = ssub.s32 %s17, %s24
    %s31 = sor.u32 %s29, %s30
    %p32 = scmp.eq.s32.totalorder %s31, 0
    %s34 = sadd.s32 %s33, 1
    %s35 = scalar_select %p32, %s33, %s34
    %p38 = pneg %p32
    %p39 = scmp.eq.s32.totalorder %s9, 1
    %p40 = por %p38, %p39
    %p41 = scmp.ne.s32.totalorder %s33, %s36
    %p42 = scmp.eq.s32.totalorder %s9, 0
    %p43 = por %p41, %p42
    %p44 = scmp.ne.s32.totalorder %s33, %s36
    %p45 = scmp.eq.s32.totalorder %s14, 1
    %p46 = por %p44, %p45
    %p47 = scmp.ne.s32.totalorder %s36, %s37
    %p48 = scmp.eq.s32.totalorder %s14, 0
    %p49 = por %p47, %p48
    %p50 = scmp.ne.s32.totalorder %s36, %s37
    %p51 = scmp.eq.s32.totalorder %s15, 1
    %p52 = por %p50, %p51
    %p54 = scmp.ne.s32.totalorder %s37, %s53
    %p55 = scmp.eq.s32.totalorder %s15, 0
    %p56 = por %p54, %p55
    %s57 = ssub.s32 %s16, %s28
    %s58 = ssub.s32 %s17, %s24
    %s59 = sor.u32 %s57, %s58
    %p60 = scmp.eq.s32.totalorder %s59, 0
    %s62 = sadd.s32 %s61, 1
    %s63 = scalar_select %p60, %s61, %s62
    %p66 = pneg %p60
    %p67 = scmp.eq.s32.totalorder %s9, 1
    %p68 = por %p66, %p67
    %p69 = scmp.ne.s32.totalorder %s61, %s64
    %p70 = scmp.eq.s32.totalorder %s9, 0
    %p71 = por %p69, %p70
    %p72 = scmp.ne.s32.totalorder %s61, %s64
    %p73 = scmp.eq.s32.totalorder %s14, 1
    %p74 = por %p72, %p73
    %p75 = scmp.ne.s32.totalorder %s64, %s65
    %p76 = scmp.eq.s32.totalorder %s14, 0
    %p77 = por %p75, %p76
    %p78 = scmp.ne.s32.totalorder %s64, %s65
    %p79 = scmp.eq.s32.totalorder %s15, 1
    %p80 = por %p78, %p79
    %p82 = scmp.ne.s32.totalorder %s65, %s81
    %p83 = scmp.eq.s32.totalorder %s15, 0
    %p84 = por %p82, %p83
    %s85 = ssub.s32 %s16, %s28
    %s86 = ssub.s32 %s17, %s24
    %s87 = sor.u32 %s85, %s86
    %p88 = scmp.eq.s32.totalorder %s87, 0
    %s90 = sadd.s32 %s89, 1
    %s91 = scalar_select %p88, %s89, %s90
    %p94 = pneg %p88
    %p95 = scmp.eq.s32.totalorder %s9, 1
    %p96 = por %p94, %p95
    %p97 = scmp.ne.s32.totalorder %s89, %s92
    %p98 = scmp.eq.s32.totalorder %s9, 0
    %p99 = por %p97, %p98
    %p100 = scmp.ne.s32.totalorder %s89, %s92
    %p101 = scmp.eq.s32.totalorder %s14, 1
    %p102 = por %p100, %p101
    %p103 = scmp.ne.s32.totalorder %s92, %s93
    %p104 = scmp.eq.s32.totalorder %s14, 0
    %p105 = por %p103, %p104
    %p106 = scmp.ne.s32.totalorder %s92, %s93
    %p107 = scmp.eq.s32.totalorder %s15, 1
    %p108 = por %p106, %p107
    %p110 = scmp.ne.s32.totalorder %s93, %s109
    %p111 = scmp.eq.s32.totalorder %s15, 0
    %p112 = por %p110, %p111
    %p113 = scmp.le.s32.totalorder 1, %s9
    %p114 = scmp.lt.s32.totalorder %s9, 3
    %p115 = pnand %p113, %p114
    %p116 = pneg %p115
    // Predicated region
    $region9: #{tpu_custom_call.1} parent=5 // pred_check
      _
    $region10: #{tpu_custom_call.1} parent=5 // pred_check_branch
      %118 = sbr.rel (%p115) target = $region12
    $region11: #{tpu_custom_call.1} parent=5 // pred_region
      %s119 = ssub.s32 %s9, 1
    $region12: #{tpu_custom_call.1} parent=5 // pred_fallthru
      _
    %p120 = scmp.lt.s32.totalorder %s9, 2
    // Predicated region
    $region13: #{tpu_custom_call.1} parent=5 // pred_check
      %p121 = pneg %p120
    $region14: #{tpu_custom_call.1} parent=5 // pred_check_branch
      %123 = sbr.rel (%p121) target = $region16
    $region15: #{tpu_custom_call.1} parent=5 // pred_region
      // Predicated region
      $region17: #{tpu_custom_call.1} parent=15 // pred_check
        %p124 = pneg %p43
      $region18: #{tpu_custom_call.1} parent=15 // pred_check_branch
        %126 = sbr.rel (%p124) target = $region20
      $region19: #{tpu_custom_call.1} parent=15 // pred_region
        %p127 = scmp.lt.s32.totalorder %s16, 1
        %s128 = scalar_select %p127, %s16, 1
        %p129 = scmp.lt.s32.totalorder %s17, 0
        %s130 = scalar_select %p129, %s17, 0
        %s131 = smul.addr %s128, 2
        %s132 = sadd.s32 %s130, %s131
        %s133 = smul.addr %s132, 8
        %s134 = scalar_lea.vmem %s0, %s133
      $region20: #{tpu_custom_call.1} parent=15 // pred_fallthru
        _
    $region16: #{tpu_custom_call.1} parent=5 // pred_fallthru
      _
    %p135 = scmp.le.s32.totalorder 1, %s9
    %p136 = scmp.lt.s32.totalorder %s9, 3
    %p137 = pnand %p135, %p136
    %p138 = pneg %p137
    // Predicated region
    $region21: #{tpu_custom_call.1} parent=5 // pred_check
      _
    $region22: #{tpu_custom_call.1} parent=5 // pred_check_branch
      %140 = sbr.rel (%p137) target = $region24
    $region23: #{tpu_custom_call.1} parent=5 // pred_region
      %s141 = ssub.s32 %s9, 1
      %p142 = scmp.lt.s32.totalorder %s18, 1
      %s143 = scalar_select %p142, %s18, 1
      %p144 = scmp.lt.s32.totalorder %s19, 0
      %s145 = scalar_select %p144, %s19, 0
      %s146 = smul.addr %s143, 2
      %s147 = sadd.s32 %s145, %s146
      %s148 = smul.addr %s147, 8
      %s149 = scalar_lea.vmem %s0, %s148
      %p150 = pneg %p49
      %p151 = pneg %p46
      %p152 = pneg %p77
      %p153 = pneg %p74
      %p154 = scmp.lt.s32.totalorder %s18, 1
      %s155 = scalar_select %p154, %s18, 1
      %p156 = scmp.lt.s32.totalorder %s19, 0
      %s157 = scalar_select %p156, %s19, 0
      %s158 = smul.addr %s155, 2
      %s159 = sadd.s32 %s157, %s158
      %s160 = smul.addr %s159, 8
      %s161 = scalar_lea.vmem %s1, %s160
      %p162 = pneg %p105
      %p163 = pneg %p102
      %p164 = scmp.lt.s32.totalorder %s18, 1
      %s165 = scalar_select %p164, %s18, 1
      %p166 = scmp.lt.s32.totalorder %s19, 0
      %s167 = scalar_select %p166, %s19, 0
      %s168 = smul.addr %s165, 2
      %s169 = sadd.s32 %s167, %s168
      %s170 = smul.addr %s169, 8
      %s171 = scalar_lea.vmem %s2, %s170
      %p172 = scmp.lt.s32.totalorder %s18, 1
      %s173 = scalar_select %p172, %s18, 1
      %p174 = scmp.lt.s32.totalorder %s19, 0
      %s175 = scalar_select %p174, %s19, 0
      %s176 = smul.addr %s173, 2
      %s177 = sadd.s32 %s175, %s176
      %s178 = smul.addr %s177, 8
      %s179 = scalar_lea.vmem %s0, %s178
      %p180 = scmp.lt.s32.totalorder %s18, 1
      %s181 = scalar_select %p180, %s18, 1
      %p182 = scmp.lt.s32.totalorder %s19, 0
      %s183 = scalar_select %p182, %s19, 0
      %s184 = smul.addr %s181, 2
      %s185 = sadd.s32 %s183, %s184
      %s186 = smul.addr %s185, 8
      %s187 = scalar_lea.vmem %s1, %s186
      %p188 = scmp.lt.s32.totalorder %s18, 1
      %s189 = scalar_select %p188, %s18, 1
      %p190 = scmp.lt.s32.totalorder %s19, 0
      %s191 = scalar_select %p190, %s19, 0
      %s192 = smul.addr %s189, 2
      %s193 = sadd.s32 %s191, %s192
      %s194 = smul.addr %s193, 8
      %s195 = scalar_lea.vmem %s2, %s194
      %v196 = vld [vmem:[%s179] sm:$0xff]
      %v197 = vld [vmem:[%s179 + $0x8] sm:$0xff]
      %v198 = vlaneseq
      %v199 = vshrl.u32 %v198, 7
      %v200 = vsub.s32 0, %v199
      %v201 = vrot.slane %v196, %v200
      %v202 = vlaneseq
      %v203 = vshrl.u32 %v202, 7
      %v204 = vsub.s32 7, %v203
      %v205 = vrot.slane %v197, %v204
      %vm209 = vcmask 1041408
      %v210 = vrot.slane %v201, 6
      %v211 = vrot.slane %v196, 6
      %v212 = vsel %vm209, %v210, %v211
      %v213 = vrot.slane %v197, 6
      %v214 = vsel %vm209, %v211, %v213
      %vm218 = vcmask 1046528
      %v219 = vrot.slane %v201, 1
      %v220 = vrot.slane %v196, 1
      %v221 = vsel %vm218, %v219, %v220
      %v222 = vrot.slane %v197, 1
      %v223 = vsel %vm218, %v220, %v222
      %v224 = vrot.slane %v205, 1
      %v225 = vsel %vm218, %v222, %v224
      %v231 = vsel %vm218, %v224, %v219
      %v232 = vadd.f32 %v201, %v221
      %v233 = vadd.f32 %v196, %v223
      %v234 = vadd.f32 %v197, %v225
      %v235 = vadd.f32 %v205, %v231
      %vm240 = vcmask 1045504
      %v241 = vrot.slane %v232, 2
      %v242 = vrot.slane %v233, 2
      %v243 = vsel %vm240, %v241, %v242
      %v244 = vrot.slane %v234, 2
      %v245 = vsel %vm240, %v242, %v244
      %v246 = vrot.slane %v235, 2
      %v247 = vsel %vm240, %v244, %v246
      %v251 = vadd.f32 %v232, %v243
      %v252 = vadd.f32 %v233, %v245
      %v253 = vadd.f32 %v234, %v247
      %vm257 = vcmask 1040384
      %v258 = vrot.slane %v251, 7
      %v259 = vrot.slane %v252, 7
      %v260 = vsel %vm257, %v258, %v259
      %v261 = vrot.slane %v253, 7
      %v262 = vsel %vm257, %v259, %v261
      %v265 = vadd.f32 %v212, %v260
      %v266 = vadd.f32 %v214, %v262
      %v267 = vmul.f32 %v265, 0.2
      %v268 = vmul.f32 %v266, 0.2
      %vm269 = vcmask 64512
      %270 = vst.msk [vmem:[%s195] sm:$0xff] %vm269, %v267
      %271 = vst.msk [vmem:[%s195 + $0x8] sm:$0xff] %vm269, %v268
      %v272 = vsub.f32 %v196, %v267
      %v273 = vsub.f32 %v197, %v268
      %274 = vst.msk [vmem:[%s187] sm:$0xff] %vm269, %v272
      %275 = vst.msk [vmem:[%s187 + $0x8] sm:$0xff] %vm269, %v273
      %p276 = scmp.lt.s32.totalorder %s18, 1
      %s277 = scalar_select %p276, %s18, 1
      %p278 = scmp.lt.s32.totalorder %s19, 0
      %s279 = scalar_select %p278, %s19, 0
      %s280 = smul.addr %s277, 2
      %s281 = sadd.s32 %s279, %s280
      %s282 = smul.addr %s281, 8
      %s283 = scalar_lea.vmem %s1, %s282
      %p284 = scmp.lt.s32.totalorder %s18, 1
      %s285 = scalar_select %p284, %s18, 1
      %p286 = scmp.lt.s32.totalorder %s19, 0
      %s287 = scalar_select %p286, %s19, 0
      %s288 = smul.addr %s285, 2
      %s289 = sadd.s32 %s287, %s288
      %s290 = smul.addr %s289, 8
      %s291 = scalar_lea.vmem %s2, %s290
      // Predicated region
      $region25: #{tpu_custom_call.1} parent=23 // pred_check
        %p292 = pneg %p74
      $region26: #{tpu_custom_call.1} parent=23 // pred_check_branch
        %294 = sbr.rel (%p292) target = $region28
      $region27: #{tpu_custom_call.1} parent=23 // pred_region
        _
      $region28: #{tpu_custom_call.1} parent=23 // pred_fallthru
        _
      // Predicated region
      $region29: #{tpu_custom_call.1} parent=23 // pred_check
        %p295 = pneg %p102
      $region30: #{tpu_custom_call.1} parent=23 // pred_check_branch
        %297 = sbr.rel (%p295) target = $region32
      $region31: #{tpu_custom_call.1} parent=23 // pred_region
        _
      $region32: #{tpu_custom_call.1} parent=23 // pred_fallthru
        _
    $region24: #{tpu_custom_call.1} parent=5 // pred_fallthru
      _
    %p298 = scmp.le.s32.totalorder 2, %s9
    // Predicated region
    $region33: #{tpu_custom_call.1} parent=5 // pred_check
      %p299 = pneg %p298
    $region34: #{tpu_custom_call.1} parent=5 // pred_check_branch
      %301 = sbr.rel (%p299) target = $region36
    $region35: #{tpu_custom_call.1} parent=5 // pred_region
      %s302 = ssub.s32 %s9, 2
      // Predicated region
      $region37: #{tpu_custom_call.1} parent=35 // pred_check
        %p303 = pneg %p80
      $region38: #{tpu_custom_call.1} parent=35 // pred_check_branch
        %305 = sbr.rel (%p303) target = $region40
      $region39: #{tpu_custom_call.1} parent=35 // pred_region
        %p306 = scmp.lt.s32.totalorder %s20, 1
        %s307 = scalar_select %p306, %s20, 1
        %p308 = scmp.lt.s32.totalorder %s21, 0
        %s309 = scalar_select %p308, %s21, 0
        %s310 = smul.addr %s307, 2
        %s311 = sadd.s32 %s309, %s310
        %s312 = smul.addr %s311, 8
        %s313 = scalar_lea.vmem %s1, %s312
      $region40: #{tpu_custom_call.1} parent=35 // pred_fallthru
        _
      // Predicated region
      $region41: #{tpu_custom_call.1} parent=35 // pred_check
        %p314 = pneg %p108
      $region42: #{tpu_custom_call.1} parent=35 // pred_check_branch
        %316 = sbr.rel (%p314) target = $region44
      $region43: #{tpu_custom_call.1} parent=35 // pred_region
        %p317 = scmp.lt.s32.totalorder %s20, 1
        %s318 = scalar_select %p317, %s20, 1
        %p319 = scmp.lt.s32.totalorder %s21, 0
        %s320 = scalar_select %p319, %s21, 0
        %s321 = smul.addr %s318, 2
        %s322 = sadd.s32 %s320, %s321
        %s323 = smul.addr %s322, 8
        %s324 = scalar_lea.vmem %s2, %s323
      $region44: #{tpu_custom_call.1} parent=35 // pred_fallthru
        _
    $region36: #{tpu_custom_call.1} parent=5 // pred_fallthru
      _
  $region6: #{tpu_custom_call.1} parent=0 // loop_footer
    %s13 = sadd.s32 1, %s9
  $region7: #{tpu_custom_call.1} parent=0 // loop_footer_branch
    %8 = sbr.rel target = $region3
  $region8: #{tpu_custom_call.1} parent=0 // loop_exit
    _

</llo_original>
